<compile_context>
chip_gen: v7x
topology: tpu7x:2x2x1
jax: 0.10.0
libtpu: 0.0.40
codegen_flags: <defaults>
</compile_context>

<pallas_src>
from typing import NamedTuple

import jax
import jax.numpy as jnp
from jax.experimental import pallas as pl
from jax.experimental.pallas import tpu as pltpu

CLIP_RANGE = 0.1


def _round_up(x, m):
    return ((x + m - 1) // m) * m


class GRPOTileConfig(NamedTuple):
    B: int
    S: int
    H: int
    V: int
    TB: int        # sequences per row tile
    TM: int        # rows per MXU tile (= TB * S)
    TV: int        # vocab tile (lane-aligned)
    NV: int        # vocab grid extent
    NI: int        # row grid extent
    V_pad: int     # padded vocab (= NV * TV)
    vmem_limit: int


def _vmem_estimate(TM, TV, H, TB):
    """Rough VMEM footprint (bytes) for one grid step (double-buffered I/O)."""
    w_tile = 2 * H * TV * 2            # bf16 W tile, double-buffered
    x_tile = 2 * TM * H * 2            # bf16 x tile, double-buffered
    small = 4 * 2 * TM * 128 * 4       # four (TM,1) f32 inputs, lane-padded
    out = 2 * max(TB, 1) * 128 * 4     # output slab
    state = TM * 128 * 4               # merged online-softmax scratch
    temps = 4 * TM * TV * 4            # (TM,TV) f32 intermediates
    return w_tile + x_tile + small + out + state + temps


def grpo_tile_config(B, S, H, V, *, target_rows=512,
                     vmem_budget=40 * 1024 * 1024):
    """Pick sequence-aligned row tiles and a lane-aligned vocab tile.

    target_rows ~512 keeps W re-streaming near the compute/HBM ridge on all
    current TPU generations; NI is kept >= 2 whenever B >= 2 so the
    'parallel' row axis can be sharded across megacore / v7x TensorCores;
    the VMEM budget keeps the config legal on v7x's 64 MiB per-TC VMEM.
    """
    TV = min(1024, _round_up(V, 128))

    divisors = [d for d in range(1, B + 1) if B % d == 0]
    preferred = ([d for d in divisors if d <= max(B // 2, 1)]
                 if B >= 2 else divisors)

    def legal(tb):
        tm = tb * S
        return (tm % 8 == 0) or (tb == B)      # (8,128) sublane rule

    def pick(cands):
        best = None
        for tb in cands:                        # ascending
            if not legal(tb):
                continue
            if tb * S <= target_rows:
                best = tb
            elif best is None:
                best = tb
                break
        return best

    TB = pick(preferred)
    if TB is None:
        TB = pick(divisors)
    if TB is None:
        TB = B                                  # full-array block is legal
    TM = TB * S

    # Shrink the vocab tile, then the row tile, until the estimate fits.
    while TV > 128 and _vmem_estimate(TM, TV, H, TB) > vmem_budget:
        TV = max(128, ((TV // 2) // 128) * 128)
    while _vmem_estimate(TM, TV, H, TB) > vmem_budget:
        smaller = [d for d in divisors if d < TB and legal(d)]
        if not smaller:
            break
        TB = max(smaller)
        TM = TB * S

    NV = -(-V // TV)
    V_pad = NV * TV
    NI = (B * S) // TM
    vmem_limit = int(min(max(32 * 1024 * 1024,
                             2 * _vmem_estimate(TM, TV, H, TB)),
                         64 * 1024 * 1024))
    return GRPOTileConfig(B, S, H, V, TB, TM, TV, NV, NI, V_pad, vmem_limit)


def prepare_unembedding(w, cfg):
    """Cast W to bf16 and pad the vocab once, OUTSIDE the per-step hot path."""
    w_p = w.astype(jnp.bfloat16)
    if cfg.V_pad != w.shape[1]:
        w_p = jnp.pad(w_p, ((0, 0), (0, cfg.V_pad - w.shape[1])))
    return w_p


def _make_grpo_kernel(cfg, clip):
    S, V = cfg.S, cfg.V
    TB, TM, TV, NV = cfg.TB, cfg.TM, cfg.TV, cfg.NV
    has_pad = (V % TV) != 0

    def emit(log_cur, labels, lgen_ref, lref_ref, rwd_ref, out_ref):
        mask = (labels != -100).astype(jnp.float32)                 # (TM,1)
        log_gen = lgen_ref[...]
        log_refp = lref_ref[...]
        reward = rwd_ref[...]

        ratio = jnp.exp(log_cur - log_gen)
        clipped = jnp.clip(ratio, 1.0 - clip, 1.0 + clip)
        pol_tok = jnp.minimum(ratio * reward, clipped * reward) * mask
        kl_tok = (jnp.exp(log_refp - log_cur) - 1.0
                  - log_refp + log_cur) * mask

        # One fused segment matmul: rows r in [t*S,(t+1)*S) belong to seq t.
        cidx = jax.lax.broadcasted_iota(jnp.int32, (TM, 3), 1)
        rhs = jnp.where(cidx == 0, pol_tok,
                        jnp.where(cidx == 1, kl_tok, mask))         # (TM,3)
        r_iota = jax.lax.broadcasted_iota(jnp.int32, (TB, TM), 1)
        t_iota = jax.lax.broadcasted_iota(jnp.int32, (TB, TM), 0)
        lower = t_iota * S
        seg = ((r_iota >= lower) & (r_iota < lower + S)).astype(jnp.float32)
        res = jnp.dot(seg, rhs, preferred_element_type=jnp.float32)  # (TB,3)

        cnt = res[:, 2:3]
        pol_seq = res[:, 0:1] / cnt     # NaN for fully-masked seqs (torch semantics)
        kl_seq = res[:, 1:2] / cnt

        lane = jax.lax.broadcasted_iota(jnp.int32, (TB, 128), 1)
        out_ref[0] = (jnp.where(lane == 0, pol_seq, 0.0)
                      + jnp.where(lane == 1, kl_seq, 0.0))

    if NV == 1:
        # Statically specialized single-vocab-tile path: no online-softmax
        # scratch, no init/finalize phases, 1-D grid.
        def kernel(x_ref, w_ref, lbl_ref, lgen_ref, lref_ref, rwd_ref, out_ref):
            logits = jnp.dot(x_ref[...], w_ref[...],
                             preferred_element_type=jnp.float32)    # (TM,TV)
            labels = lbl_ref[...]
            safe = jnp.maximum(labels, 0)
            lcol = jax.lax.broadcasted_iota(jnp.int32, (TM, TV), 1)
            masked = (jnp.where(lcol < V, logits, -jnp.inf)
                      if has_pad else logits)
            m = jnp.max(masked, axis=-1, keepdims=True)
            l = jnp.sum(jnp.exp(masked - m), axis=-1, keepdims=True)
            g = jnp.sum(jnp.where(lcol == safe, logits, 0.0),
                        axis=-1, keepdims=True)
            log_cur = g - (m + jnp.log(l))
            emit(log_cur, labels, lgen_ref, lref_ref, rwd_ref, out_ref)

        return kernel

    def kernel(x_ref, w_ref, lbl_ref, lgen_ref, lref_ref, rwd_ref, out_ref,
               state_ref):
        v = pl.program_id(1)
        nv = pl.num_programs(1)
        lane128 = jax.lax.broadcasted_iota(jnp.int32, (TM, 128), 1)

        @pl.when(v == 0)
        def _init():
            # lane 0 = running max, lane 1 = running exp-sum, lane 2 = gathered logit
            state_ref[...] = jnp.where(lane128 == 0,
                                       jnp.float32(-jnp.inf),
                                       jnp.float32(0.0))

        # ---- logits tile on the MXU (bf16 operands, f32 accumulation) ------
        logits = jnp.dot(x_ref[...], w_ref[...],
                         preferred_element_type=jnp.float32)         # (TM,TV)

        labels = lbl_ref[...]                                        # (TM,1)
        safe = jnp.maximum(labels, 0)
        local_tgt = safe - v * TV                                    # (TM,1)
        lcol = jax.lax.broadcasted_iota(jnp.int32, (TM, TV), 1)
        if has_pad:
            # Only the final tile has padded columns (threshold >= TV on the
            # earlier tiles, so the select is a no-op there).
            masked = jnp.where(lcol < (V - v * TV), logits, -jnp.inf)
        else:
            masked = logits

        tile_max = jnp.max(masked, axis=-1, keepdims=True)
        tile_g = jnp.sum(jnp.where(lcol == local_tgt, logits, 0.0),
                         axis=-1, keepdims=True)

        # ---- online logsumexp update (merged (TM,128) state) ---------------
        st = state_ref[...]
        m_old = st[:, 0:1]
        l_old = st[:, 1:2]
        g_old = st[:, 2:3]
        m_new = jnp.maximum(m_old, tile_max)
        alpha = jnp.exp(m_old - m_new)            # == 0 at v == 0 (m_old = -inf)
        l_new = l_old * alpha + jnp.sum(jnp.exp(masked - m_new),
                                        axis=-1, keepdims=True)
        g_new = g_old + tile_g
        state_ref[...] = (jnp.where(lane128 == 0, m_new, 0.0)
                          + jnp.where(lane128 == 1, l_new, 0.0)
                          + jnp.where(lane128 == 2, g_new, 0.0))

        # ---- finalize once per row tile -------------------------------------
        @pl.when(v == nv - 1)
        def _finalize():
            lse = m_new + jnp.log(l_new)
            log_cur = g_new - lse
            emit(log_cur, labels, lgen_ref, lref_ref, rwd_ref, out_ref)

    return kernel


def grpo_forward(x_emb, w_prepared, label_ids, log_gen_probs, log_ref_probs,
                 rewards, cfg, clip=CLIP_RANGE):
    """GRPO.forward: returns (policy_loss, kl_divergence).

    `w_prepared` must come from prepare_unembedding(w, cfg) (bf16, padded),
    so the full HxV matrix is not re-cast / re-padded on every step.
    """
    B, S, H = x_emb.shape
    assert (B, S, H) == (cfg.B, cfg.S, cfg.H)
    assert w_prepared.shape == (H, cfg.V_pad) and w_prepared.dtype == jnp.bfloat16
    R = B * S
    TB, TM, TV, NV, NI = cfg.TB, cfg.TM, cfg.TV, cfg.NV, cfg.NI

    x2 = x_emb.reshape(R, H).astype(jnp.bfloat16)
    lbl = label_ids.astype(jnp.int32).reshape(R, 1)
    lg = log_gen_probs.astype(jnp.float32).reshape(R, 1)
    lr = log_ref_probs.astype(jnp.float32).reshape(R, 1)
    rw = jnp.repeat(rewards.astype(jnp.float32), S).reshape(R, 1)

    kernel = _make_grpo_kernel(cfg, clip)

    if NV == 1:
        grid = (NI,)
        rmap = lambda i: (i, 0)
        wmap = lambda i: (0, 0)
        omap = lambda i: (i, 0, 0)
        scratch = []
        dims = ("parallel",)
    else:
        grid = (NI, NV)
        rmap = lambda i, v: (i, 0)
        wmap = lambda i, v: (0, v)
        omap = lambda i, v: (i, 0, 0)
        scratch = [pltpu.VMEM((TM, 128), jnp.float32)]   # lanes 0/1/2 = m/l/g
        dims = ("parallel", "arbitrary")

    out = pl.pallas_call(
        kernel,
        out_shape=jax.ShapeDtypeStruct((NI, TB, 128), jnp.float32),
        grid=grid,
        in_specs=[
            pl.BlockSpec((TM, H), rmap),    # embedded tokens (bf16)
            pl.BlockSpec((H, TV), wmap),    # unembedding tile (bf16)
            pl.BlockSpec((TM, 1), rmap),    # raw label ids
            pl.BlockSpec((TM, 1), rmap),    # log_gen_probs
            pl.BlockSpec((TM, 1), rmap),    # log_ref_probs
            pl.BlockSpec((TM, 1), rmap),    # per-token reward
        ],
        out_specs=pl.BlockSpec((1, TB, 128), omap),
        scratch_shapes=scratch,
        compiler_params=pltpu.CompilerParams(
            dimension_semantics=dims,
            vmem_limit_bytes=cfg.vmem_limit),
    )(x2, w_prepared, lbl, lg, lr, rw)

    per_seq = out.reshape(B, 128)
    policy_loss = jnp.mean(per_seq[:, 0])
    kl_divergence = jnp.mean(per_seq[:, 1])
    return policy_loss, kl_divergence


def grpo_forward_ref(x_emb, w, label_ids, log_gen_probs, log_ref_probs,
                     rewards, clip=CLIP_RANGE):
    """Pure-JAX reference mirroring the PyTorch forward (same bf16 operands)."""
    logits = jnp.einsum('bsh,hv->bsv',
                        x_emb.astype(jnp.bfloat16), w.astype(jnp.bfloat16),
                        preferred_element_type=jnp.float32)
    safe = jnp.maximum(label_ids, 0)
    maskf = (label_ids != -100).astype(jnp.float32)
    probs = jax.nn.softmax(logits, axis=-1)
    tok_probs = jnp.take_along_axis(probs, safe[..., None], axis=-1)[..., 0]
    log_cur = jnp.log(tok_probs)
    ratio = jnp.exp(log_cur - log_gen_probs)
    ploss = jnp.minimum(ratio * rewards[:, None],
                        jnp.clip(ratio, 1 - clip, 1 + clip) * rewards[:, None])
    ploss = jnp.sum(ploss * maskf, axis=-1) / jnp.sum(maskf, axis=-1)
    ploss = jnp.mean(ploss)
    kl = jnp.exp(log_ref_probs - log_cur) - 1 - log_ref_probs + log_cur
    kl = jnp.sum(kl * maskf, axis=-1) / jnp.sum(maskf, axis=-1)
    kl = jnp.mean(kl)
    return ploss, kl


if __name__ == "__main__":
    def run_case(B, S, H, V, case):
        key = jax.random.fold_in(jax.random.PRNGKey(0), case)
        k_emb, k_w, k_tok, k_lbl, k_lg, k_lr, k_rw = jax.random.split(key, 7)

        # deterministic synthetic policy-model parameters (embedding + vocab head)
        emb = jax.random.normal(k_emb, (V, H), dtype=jnp.float32) * 0.02
        w = jax.random.normal(k_w, (H, V), dtype=jnp.float32) * 0.02

        # synthetic GRPO sample batch
        token_ids = jax.random.randint(k_tok, (B, S), 0, V, dtype=jnp.int32)
        label_ids = jax.random.randint(k_lbl, (B, S), 0, V, dtype=jnp.int32)
        label_ids = label_ids.at[:, :2].set(-100)     # prompt tokens ignored
        log_gen_probs = -jax.random.uniform(k_lg, (B, S), dtype=jnp.float32,
                                            minval=0.5, maxval=5.0)
        log_ref_probs = -jax.random.uniform(k_lr, (B, S), dtype=jnp.float32,
                                            minval=0.5, maxval=5.0)
        rewards = jax.random.normal(k_rw, (B,), dtype=jnp.float32)

        # TODO(synk): the real policy_model.forward_policy is a full transformer;
        # it is modeled here as embedding lookup (JAX glue) + vocab head (kernel).
        x_emb = emb[token_ids]                        # (B, S, H)

        cfg = grpo_tile_config(B, S, H, V)
        w_p = prepare_unembedding(w, cfg)             # hoisted out of the hot path

        pol, kl = grpo_forward(x_emb, w_p, label_ids, log_gen_probs,
                               log_ref_probs, rewards, cfg)
        jax.block_until_ready((pol, kl))

        pol_r, kl_r = grpo_forward_ref(x_emb, w, label_ids, log_gen_probs,
                                       log_ref_probs, rewards)
        assert jnp.allclose(pol, pol_r, rtol=1e-3, atol=1e-3), (case, pol, pol_r)
        assert jnp.allclose(kl, kl_r, rtol=1e-3, atol=1e-3), (case, kl, kl_r)

    # Case 0: single vocab tile -> statically specialized NV==1 path, NI=2.
    run_case(B=2, S=8, H=32, V=640, case=0)
    # Case 1: two vocab tiles with a padded last tile -> online-logsumexp path.
    run_case(B=4, S=8, H=32, V=1408, case=1)

    print("KERNEL_OK")
</pallas_src>

<mosaic_0001>
module attributes {stable_mosaic.version = 11 : i64} {
  func.func @kernel(%arg0: i32, %arg1: memref<8x32xbf16, #tpu.memory_space<vmem>>, %arg2: memref<32x640xbf16, #tpu.memory_space<vmem>>, %arg3: memref<8x1xi32, #tpu.memory_space<vmem>>, %arg4: memref<8x1xf32, #tpu.memory_space<vmem>>, %arg5: memref<8x1xf32, #tpu.memory_space<vmem>>, %arg6: memref<8x1xf32, #tpu.memory_space<vmem>>, %arg7: memref<1x1x128xf32, #tpu.memory_space<vmem>>) attributes {dimension_semantics = [#tpu.dimension_semantics<parallel>], iteration_bounds = array<i64: 2>, scalar_prefetch = 0 : i64, scratch_operands = 0 : i64, tpu.core_type = #tpu.core_type<tc>, window_params = [{transform_indices = @transform_0, window_bounds = array<i64: 8, 32>}, {pipeline_mode = #tpu.pipeline_mode<synchronous>, transform_indices = @transform_1, window_bounds = array<i64: 32, 640>}, {transform_indices = @transform_2, window_bounds = array<i64: 8, 1>}, {transform_indices = @transform_3, window_bounds = array<i64: 8, 1>}, {transform_indices = @transform_4, window_bounds = array<i64: 8, 1>}, {transform_indices = @transform_5, window_bounds = array<i64: 8, 1>}, {transform_indices = @transform_6, window_bounds = array<i64: 1, 1, 128>}]} {
    %c0 = arith.constant 0 : index
    %c0_0 = arith.constant 0 : index
    %0 = vector.load %arg1[%c0, %c0_0] : memref<8x32xbf16, #tpu.memory_space<vmem>>, vector<8x32xbf16>
    %c0_1 = arith.constant 0 : index
    %c0_2 = arith.constant 0 : index
    %1 = vector.load %arg2[%c0_1, %c0_2] : memref<32x640xbf16, #tpu.memory_space<vmem>>, vector<32x640xbf16>
    %cst = arith.constant dense<0.000000e+00> : vector<8x640xf32>
    %2 = tpu.matmul %0, %1, %cst {dimension_numbers = #tpu.dot_dimension_numbers<[1], [0], [0], [1], [0, 0, 1, 1], [], []>} : vector<8x32xbf16>, vector<32x640xbf16>, vector<8x640xf32> -> vector<8x640xf32>
    %c0_3 = arith.constant 0 : index
    %c0_4 = arith.constant 0 : index
    %3 = vector.load %arg3[%c0_3, %c0_4] : memref<8x1xi32, #tpu.memory_space<vmem>>, vector<8x1xi32>
    %c0_i32 = arith.constant 0 : i32
    %4 = vector.broadcast %c0_i32 : i32 to vector<8x1xi32>
    %5 = arith.maxsi %3, %4 : vector<8x1xi32>
    %6 = tpu.iota {dimensions = array<i32: 1>} : vector<8x640xi32>
    %cst_5 = arith.constant dense<0xFF800000> : vector<8xf32>
    %7 = vector.multi_reduction <maximumf>, %2, %cst_5 [1] : vector<8x640xf32> to vector<8xf32>
    %8 = vector.shape_cast %7 : vector<8xf32> to vector<8x1xf32>
    %9 = vector.broadcast %8 : vector<8x1xf32> to vector<8x640xf32>
    %10 = arith.subf %2, %9 : vector<8x640xf32>
    %11 = math.exp %10 : vector<8x640xf32>
    %cst_6 = arith.constant dense<0.000000e+00> : vector<8xf32>
    %12 = vector.multi_reduction <add>, %11, %cst_6 [1] : vector<8x640xf32> to vector<8xf32>
    %13 = vector.shape_cast %12 : vector<8xf32> to vector<8x1xf32>
    %14 = vector.broadcast %5 : vector<8x1xi32> to vector<8x640xi32>
    %15 = arith.cmpi eq, %6, %14 : vector<8x640xi32>
    %cst_7 = arith.constant 0.000000e+00 : f32
    %16 = vector.broadcast %cst_7 : f32 to vector<8x640xf32>
    %17 = arith.select %15, %2, %16 : vector<8x640xi1>, vector<8x640xf32>
    %cst_8 = arith.constant dense<0.000000e+00> : vector<8xf32>
    %18 = vector.multi_reduction <add>, %17, %cst_8 [1] : vector<8x640xf32> to vector<8xf32>
    %19 = vector.shape_cast %18 : vector<8xf32> to vector<8x1xf32>
    %20 = math.log %13 : vector<8x1xf32>
    %21 = arith.addf %8, %20 : vector<8x1xf32>
    %22 = arith.subf %19, %21 : vector<8x1xf32>
    %c-100_i32 = arith.constant -100 : i32
    %23 = vector.broadcast %c-100_i32 : i32 to vector<8x1xi32>
    %24 = arith.cmpi ne, %3, %23 : vector<8x1xi32>
    %25 = arith.extui %24 : vector<8x1xi1> to vector<8x1xi32>
    %26 = arith.sitofp %25 : vector<8x1xi32> to vector<8x1xf32>
    %c0_9 = arith.constant 0 : index
    %c0_10 = arith.constant 0 : index
    %27 = vector.load %arg4[%c0_9, %c0_10] : memref<8x1xf32, #tpu.memory_space<vmem>>, vector<8x1xf32>
    %c0_11 = arith.constant 0 : index
    %c0_12 = arith.constant 0 : index
    %28 = vector.load %arg5[%c0_11, %c0_12] : memref<8x1xf32, #tpu.memory_space<vmem>>, vector<8x1xf32>
    %c0_13 = arith.constant 0 : index
    %c0_14 = arith.constant 0 : index
    %29 = vector.load %arg6[%c0_13, %c0_14] : memref<8x1xf32, #tpu.memory_space<vmem>>, vector<8x1xf32>
    %30 = arith.subf %22, %27 : vector<8x1xf32>
    %31 = math.exp %30 : vector<8x1xf32>
    %cst_15 = arith.constant 0.899999976 : f32
    %cst_16 = arith.constant 1.100000e+00 : f32
    %32 = vector.broadcast %cst_15 : f32 to vector<8x1xf32>
    %33 = arith.maximumf %32, %31 : vector<8x1xf32>
    %34 = vector.broadcast %cst_16 : f32 to vector<8x1xf32>
    %35 = arith.minimumf %34, %33 : vector<8x1xf32>
    %36 = arith.mulf %31, %29 : vector<8x1xf32>
    %37 = arith.mulf %35, %29 : vector<8x1xf32>
    %38 = arith.minimumf %36, %37 : vector<8x1xf32>
    %39 = arith.mulf %38, %26 : vector<8x1xf32>
    %40 = arith.subf %28, %22 : vector<8x1xf32>
    %41 = math.exp %40 : vector<8x1xf32>
    %cst_17 = arith.constant 1.000000e+00 : f32
    %42 = vector.broadcast %cst_17 : f32 to vector<8x1xf32>
    %43 = arith.subf %41, %42 : vector<8x1xf32>
    %44 = arith.subf %43, %28 : vector<8x1xf32>
    %45 = arith.addf %44, %22 : vector<8x1xf32>
    %46 = arith.mulf %45, %26 : vector<8x1xf32>
    %47 = tpu.iota {dimensions = array<i32: 1>} : vector<8x3xi32>
    %c0_i32_18 = arith.constant 0 : i32
    %48 = vector.broadcast %c0_i32_18 : i32 to vector<8x3xi32>
    %49 = arith.cmpi eq, %47, %48 : vector<8x3xi32>
    %c1_i32 = arith.constant 1 : i32
    %50 = vector.broadcast %c1_i32 : i32 to vector<8x3xi32>
    %51 = arith.cmpi eq, %47, %50 : vector<8x3xi32>
    %52 = vector.shape_cast %46 : vector<8x1xf32> to vector<8x1xf32>
    %53 = vector.broadcast %52 : vector<8x1xf32> to vector<8x3xf32>
    %54 = vector.shape_cast %26 : vector<8x1xf32> to vector<8x1xf32>
    %55 = vector.broadcast %54 : vector<8x1xf32> to vector<8x3xf32>
    %56 = arith.select %51, %53, %55 : vector<8x3xi1>, vector<8x3xf32>
    %57 = vector.shape_cast %39 : vector<8x1xf32> to vector<8x1xf32>
    %58 = vector.broadcast %57 : vector<8x1xf32> to vector<8x3xf32>
    %59 = arith.select %49, %58, %56 : vector<8x3xi1>, vector<8x3xf32>
    %60 = tpu.iota {dimensions = array<i32: 1>} : vector<1x8xi32>
    %61 = tpu.iota {dimensions = array<i32: 0>} : vector<1x8xi32>
    %c8_i32 = arith.constant 8 : i32
    %62 = vector.broadcast %c8_i32 : i32 to vector<1x8xi32>
    %63 = arith.muli %61, %62 : vector<1x8xi32>
    %64 = arith.cmpi sge, %60, %63 : vector<1x8xi32>
    %c8_i32_19 = arith.constant 8 : i32
    %65 = vector.broadcast %c8_i32_19 : i32 to vector<1x8xi32>
    %66 = arith.addi %63, %65 : vector<1x8xi32>
    %67 = arith.cmpi slt, %60, %66 : vector<1x8xi32>
    %68 = arith.andi %64, %67 : vector<1x8xi1>
    %69 = arith.extui %68 : vector<1x8xi1> to vector<1x8xi32>
    %70 = arith.sitofp %69 : vector<1x8xi32> to vector<1x8xf32>
    %cst_20 = arith.constant dense<0.000000e+00> : vector<1x3xf32>
    %71 = tpu.matmul %70, %59, %cst_20 {dimension_numbers = #tpu.dot_dimension_numbers<[1], [0], [0], [1], [0, 0, 1, 1], [], []>} : vector<1x8xf32>, vector<8x3xf32>, vector<1x3xf32> -> vector<1x3xf32>
    %72 = vector.extract_strided_slice %71 {offsets = [0, 2], sizes = [1, 1], strides = [1, 1]} : vector<1x3xf32> to vector<1x1xf32>
    %73 = vector.extract_strided_slice %71 {offsets = [0, 0], sizes = [1, 1], strides = [1, 1]} : vector<1x3xf32> to vector<1x1xf32>
    %74 = arith.divf %73, %72 : vector<1x1xf32>
    %75 = vector.extract_strided_slice %71 {offsets = [0, 1], sizes = [1, 1], strides = [1, 1]} : vector<1x3xf32> to vector<1x1xf32>
    %76 = arith.divf %75, %72 : vector<1x1xf32>
    %77 = tpu.iota {dimensions = array<i32: 1>} : vector<1x128xi32>
    %c0_i32_21 = arith.constant 0 : i32
    %78 = vector.broadcast %c0_i32_21 : i32 to vector<1x128xi32>
    %79 = arith.cmpi eq, %77, %78 : vector<1x128xi32>
    %cst_22 = arith.constant 0.000000e+00 : f32
    %80 = vector.shape_cast %74 : vector<1x1xf32> to vector<1x1xf32>
    %81 = vector.broadcast %80 : vector<1x1xf32> to vector<1x128xf32>
    %82 = vector.broadcast %cst_22 : f32 to vector<1x128xf32>
    %83 = arith.select %79, %81, %82 : vector<1x128xi1>, vector<1x128xf32>
    %c1_i32_23 = arith.constant 1 : i32
    %84 = vector.broadcast %c1_i32_23 : i32 to vector<1x128xi32>
    %85 = arith.cmpi eq, %77, %84 : vector<1x128xi32>
    %cst_24 = arith.constant 0.000000e+00 : f32
    %86 = vector.shape_cast %76 : vector<1x1xf32> to vector<1x1xf32>
    %87 = vector.broadcast %86 : vector<1x1xf32> to vector<1x128xf32>
    %88 = vector.broadcast %cst_24 : f32 to vector<1x128xf32>
    %89 = arith.select %85, %87, %88 : vector<1x128xi1>, vector<1x128xf32>
    %90 = arith.addf %83, %89 : vector<1x128xf32>
    %c0_25 = arith.constant 0 : index
    %c0_26 = arith.constant 0 : index
    %c0_27 = arith.constant 0 : index
    %91 = vector.load %arg7[%c0_25, %c0_26, %c0_27] : memref<1x1x128xf32, #tpu.memory_space<vmem>>, vector<1x1x128xf32>
    %92 = vector.shape_cast %91 : vector<1x1x128xf32> to vector<1x128xf32>
    %93 = vector.shape_cast %90 : vector<1x128xf32> to vector<1x1x128xf32>
    tpu.vector_store %arg7[%c0_25, %c0_26, %c0_27], %93 {strides = array<i32>} : memref<1x1x128xf32, #tpu.memory_space<vmem>>, vector<1x1x128xf32>,
    return
  }
  func.func @transform_0(%arg0: i32) -> (i32, i32) {
    %c0_i32 = arith.constant 0 : i32
    %c0_i32_0 = arith.constant 0 : i32
    return %arg0, %c0_i32 : i32, i32
  }
  func.func @transform_1(%arg0: i32) -> (i32, i32) {
    %c0_i32 = arith.constant 0 : i32
    %c0_i32_0 = arith.constant 0 : i32
    %c0_i32_1 = arith.constant 0 : i32
    return %c0_i32, %c0_i32_0 : i32, i32
  }
  func.func @transform_2(%arg0: i32) -> (i32, i32) {
    %c0_i32 = arith.constant 0 : i32
    %c0_i32_0 = arith.constant 0 : i32
    return %arg0, %c0_i32 : i32, i32
  }
  func.func @transform_3(%arg0: i32) -> (i32, i32) {
    %c0_i32 = arith.constant 0 : i32
    %c0_i32_0 = arith.constant 0 : i32
    return %arg0, %c0_i32 : i32, i32
  }
  func.func @transform_4(%arg0: i32) -> (i32, i32) {
    %c0_i32 = arith.constant 0 : i32
    %c0_i32_0 = arith.constant 0 : i32
    return %arg0, %c0_i32 : i32, i32
  }
  func.func @transform_5(%arg0: i32) -> (i32, i32) {
    %c0_i32 = arith.constant 0 : i32
    %c0_i32_0 = arith.constant 0 : i32
    return %arg0, %c0_i32 : i32, i32
  }
  func.func @transform_6(%arg0: i32) -> (i32, i32, i32) {
    %c0_i32 = arith.constant 0 : i32
    %c0_i32_0 = arith.constant 0 : i32
    %c0_i32_1 = arith.constant 0 : i32
    return %arg0, %c0_i32, %c0_i32_0 : i32, i32, i32
  }
}

</mosaic_0001>

<llo_original>
// kernel: tpu_custom_call.1
$region0: #{tpu_custom_call.1}
  #allocation0 [shape = 'u32[]', space=smem, size = 0x4, offset = 0x4, fixed_abs, tag = 'smem constant byte address 0x4 - core index']
  #allocation1 [shape = 'u32[144,128]{1,0:T(1,128)}', space=vmem, size = 0x12000, scoped, tag = 'internal scratch']
  %s0 = inlined_call_operand.vmem [shape: bf16[16,32], index: 0, kind: input, shape index: {}]
  %s1 = inlined_call_operand.hbm [shape: bf16[32,640], index: 1, kind: input, shape index: {}]
  %s2 = inlined_call_operand.vmem [shape: s32[16,1], index: 2, kind: input, shape index: {}]
  %s3 = inlined_call_operand.vmem [shape: f32[16,1], index: 3, kind: input, shape index: {}]
  %s4 = inlined_call_operand.vmem [shape: f32[16,1], index: 4, kind: input, shape index: {}]
  %s5 = inlined_call_operand.vmem [shape: f32[16,1], index: 5, kind: input, shape index: {}]
  %s6 = inlined_call_operand.hbm [shape: f32[2,1,128], index: 6, kind: output, shape index: {}]
  %s7 = sld [smem:[#allocation0]]
  $region61: #{tpu_custom_call.1} parent=0
    _
  %s9 = ssub.s32 1, %s7
  %s10 = scalar_select 0, %s9, %s7
  $region1: #{tpu_custom_call.1} parent=0
    #allocation2 [shape = 'u8[40960]{0}', space=vmem, size = 0xa000, scoped, tag = 'input window, operand 1, single buffered']
    #allocation3 [shape = 's32[2]{0}', space=sflag, size = 0x8, scoped, tag = 'scoped memory for tpu_custom_call.1']
    #allocation4 [shape = 's32[2]{0}', space=sflag, size = 0x8, scoped, tag = 'scoped memory for tpu_custom_call.1']
    #allocation5 [shape = 'u8[1024]{0}', space=vmem, size = 0x400, scoped, tag = 'output window, operand 0']
    %11 = vsyncpa [#allocation3], 0
    %12 = vsyncpa [#allocation4], 0
    %s13 = scalar_lea.sflag [#allocation4], 1
    %14 = vsyncpa %s13, 0
    loop: start=0, step=1, limit=4
    $region2: #{tpu_custom_call.1} parent=1 // loop_pre_header
      _
    $region3: #{tpu_custom_call.1} parent=1 // loop_header
      %s16 = sphi 0, %s20
      %p17 = scmp.ge.s32.totalorder %s16, 4
      %s26 = sphi 0, %s28
      %s29 = sphi 0, %s26
      %s30 = sphi 0, %s29
      %s46 = sphi 0, %s30
      %s50 = sphi 0, %s50
      %s52 = sphi 0, %s50
      %s53 = sphi 0, %s52
      %s67 = sphi 0, %s53
      %s73 = sphi 0, %s75
      %s76 = sphi 0, %s73
      %s77 = sphi 0, %s76
      %s93 = sphi 0, %s77
      %s99 = sphi 0, %s101
      %s102 = sphi 0, %s99
      %s103 = sphi 0, %s102
      %s119 = sphi 0, %s103
      %s125 = sphi 0, %s127
      %s128 = sphi 0, %s125
      %s129 = sphi 0, %s128
      %s145 = sphi 0, %s129
      %s151 = sphi 0, %s153
      %s154 = sphi 0, %s151
      %s155 = sphi 0, %s154
      %s171 = sphi 0, %s155
      %s177 = sphi 0, %s179
      %s180 = sphi 0, %s177
      %s181 = sphi 0, %s180
      %s197 = sphi 0, %s181
    $region4: #{tpu_custom_call.1} parent=1 // loop_header_branch
      %19 = sbr.rel (%p17) target = $region8
    $region5: #{tpu_custom_call.1} parent=1 // loop_body
      %s21 = ssub.s32 %s16, 1
      %s22 = ssub.s32 %s16, 2
      %s23 = sadd.s32 %s16, 1
      %s24 = ssub.s32 %s16, %s23
      %p25 = scmp.eq.s32.totalorder %s24, 0
      %s27 = sadd.s32 %s26, 1
      %s28 = scalar_select %p25, %s26, %s27
      %p31 = pneg %p25
      %p32 = scmp.eq.s32.totalorder %s16, 1
      %p33 = por %p31, %p32
      %p34 = scmp.ne.s32.totalorder %s26, %s29
      %p35 = scmp.eq.s32.totalorder %s16, 0
      %p36 = por %p34, %p35
      %p37 = scmp.ne.s32.totalorder %s26, %s29
      %p38 = scmp.eq.s32.totalorder %s21, 1
      %p39 = por %p37, %p38
      %p40 = scmp.ne.s32.totalorder %s29, %s30
      %p41 = scmp.eq.s32.totalorder %s21, 0
      %p42 = por %p40, %p41
      %p43 = scmp.ne.s32.totalorder %s29, %s30
      %p44 = scmp.eq.s32.totalorder %s22, 1
      %p45 = por %p43, %p44
      %p47 = scmp.ne.s32.totalorder %s30, %s46
      %p48 = scmp.eq.s32.totalorder %s22, 0
      %p49 = por %p47, %p48
      %s51 = sadd.s32 %s50, 1
      %p54 = scmp.eq.s32.totalorder %s16, 1
      %p55 = scmp.ne.s32.totalorder %s50, %s52
      %p56 = scmp.eq.s32.totalorder %s16, 0
      %p57 = por %p55, %p56
      %p58 = scmp.ne.s32.totalorder %s50, %s52
      %p59 = scmp.eq.s32.totalorder %s21, 1
      %p60 = por %p58, %p59
      %p61 = scmp.ne.s32.totalorder %s52, %s53
      %p62 = scmp.eq.s32.totalorder %s21, 0
      %p63 = por %p61, %p62
      %p64 = scmp.ne.s32.totalorder %s52, %s53
      %p65 = scmp.eq.s32.totalorder %s22, 1
      %p66 = por %p64, %p65
      %p68 = scmp.ne.s32.totalorder %s53, %s67
      %p69 = scmp.eq.s32.totalorder %s22, 0
      %p70 = por %p68, %p69
      %s71 = ssub.s32 %s16, %s23
      %p72 = scmp.eq.s32.totalorder %s71, 0
      %s74 = sadd.s32 %s73, 1
      %s75 = scalar_select %p72, %s73, %s74
      %p78 = pneg %p72
      %p79 = scmp.eq.s32.totalorder %s16, 1
      %p80 = por %p78, %p79
      %p81 = scmp.ne.s32.totalorder %s73, %s76
      %p82 = scmp.eq.s32.totalorder %s16, 0
      %p83 = por %p81, %p82
      %p84 = scmp.ne.s32.totalorder %s73, %s76
      %p85 = scmp.eq.s32.totalorder %s21, 1
      %p86 = por %p84, %p85
      %p87 = scmp.ne.s32.totalorder %s76, %s77
      %p88 = scmp.eq.s32.totalorder %s21, 0
      %p89 = por %p87, %p88
      %p90 = scmp.ne.s32.totalorder %s76, %s77
      %p91 = scmp.eq.s32.totalorder %s22, 1
      %p92 = por %p90, %p91
      %p94 = scmp.ne.s32.totalorder %s77, %s93
      %p95 = scmp.eq.s32.totalorder %s22, 0
      %p96 = por %p94, %p95
      %s97 = ssub.s32 %s16, %s23
      %p98 = scmp.eq.s32.totalorder %s97, 0
      %s100 = sadd.s32 %s99, 1
      %s101 = scalar_select %p98, %s99, %s100
      %p104 = pneg %p98
      %p105 = scmp.eq.s32.totalorder %s16, 1
      %p106 = por %p104, %p105
      %p107 = scmp.ne.s32.totalorder %s99, %s102
      %p108 = scmp.eq.s32.totalorder %s16, 0
      %p109 = por %p107, %p108
      %p110 = scmp.ne.s32.totalorder %s99, %s102
      %p111 = scmp.eq.s32.totalorder %s21, 1
      %p112 = por %p110, %p111
      %p113 = scmp.ne.s32.totalorder %s102, %s103
      %p114 = scmp.eq.s32.totalorder %s21, 0
      %p115 = por %p113, %p114
      %p116 = scmp.ne.s32.totalorder %s102, %s103
      %p117 = scmp.eq.s32.totalorder %s22, 1
      %p118 = por %p116, %p117
      %p120 = scmp.ne.s32.totalorder %s103, %s119
      %p121 = scmp.eq.s32.totalorder %s22, 0
      %p122 = por %p120, %p121
      %s123 = ssub.s32 %s16, %s23
      %p124 = scmp.eq.s32.totalorder %s123, 0
      %s126 = sadd.s32 %s125, 1
      %s127 = scalar_select %p124, %s125, %s126
      %p130 = pneg %p124
      %p131 = scmp.eq.s32.totalorder %s16, 1
      %p132 = por %p130, %p131
      %p133 = scmp.ne.s32.totalorder %s125, %s128
      %p134 = scmp.eq.s32.totalorder %s16, 0
      %p135 = por %p133, %p134
      %p136 = scmp.ne.s32.totalorder %s125, %s128
      %p137 = scmp.eq.s32.totalorder %s21, 1
      %p138 = por %p136, %p137
      %p139 = scmp.ne.s32.totalorder %s128, %s129
      %p140 = scmp.eq.s32.totalorder %s21, 0
      %p141 = por %p139, %p140
      %p142 = scmp.ne.s32.totalorder %s128, %s129
      %p143 = scmp.eq.s32.totalorder %s22, 1
      %p144 = por %p142, %p143
      %p146 = scmp.ne.s32.totalorder %s129, %s145
      %p147 = scmp.eq.s32.totalorder %s22, 0
      %p148 = por %p146, %p147
      %s149 = ssub.s32 %s16, %s23
      %p150 = scmp.eq.s32.totalorder %s149, 0
      %s152 = sadd.s32 %s151, 1
      %s153 = scalar_select %p150, %s151, %s152
      %p156 = pneg %p150
      %p157 = scmp.eq.s32.totalorder %s16, 1
      %p158 = por %p156, %p157
      %p159 = scmp.ne.s32.totalorder %s151, %s154
      %p160 = scmp.eq.s32.totalorder %s16, 0
      %p161 = por %p159, %p160
      %p162 = scmp.ne.s32.totalorder %s151, %s154
      %p163 = scmp.eq.s32.totalorder %s21, 1
      %p164 = por %p162, %p163
      %p165 = scmp.ne.s32.totalorder %s154, %s155
      %p166 = scmp.eq.s32.totalorder %s21, 0
      %p167 = por %p165, %p166
      %p168 = scmp.ne.s32.totalorder %s154, %s155
      %p169 = scmp.eq.s32.totalorder %s22, 1
      %p170 = por %p168, %p169
      %p172 = scmp.ne.s32.totalorder %s155, %s171
      %p173 = scmp.eq.s32.totalorder %s22, 0
      %p174 = por %p172, %p173
      %s175 = ssub.s32 %s16, %s23
      %p176 = scmp.eq.s32.totalorder %s175, 0
      %s178 = sadd.s32 %s177, 1
      %s179 = scalar_select %p176, %s177, %s178
      %p182 = pneg %p176
      %p183 = scmp.eq.s32.totalorder %s16, 1
      %p184 = por %p182, %p183
      %p185 = scmp.ne.s32.totalorder %s177, %s180
      %p186 = scmp.eq.s32.totalorder %s16, 0
      %p187 = por %p185, %p186
      %p188 = scmp.ne.s32.totalorder %s177, %s180
      %p189 = scmp.eq.s32.totalorder %s21, 1
      %p190 = por %p188, %p189
      %p191 = scmp.ne.s32.totalorder %s180, %s181
      %p192 = scmp.eq.s32.totalorder %s21, 0
      %p193 = por %p191, %p192
      %p194 = scmp.ne.s32.totalorder %s180, %s181
      %p195 = scmp.eq.s32.totalorder %s22, 1
      %p196 = por %p194, %p195
      %p198 = scmp.ne.s32.totalorder %s181, %s197
      %p199 = scmp.eq.s32.totalorder %s22, 0
      %p200 = por %p198, %p199
      %p201 = scmp.le.s32.totalorder 1, %s16
      %p202 = scmp.lt.s32.totalorder %s16, 3
      %p203 = pnand %p201, %p202
      %p204 = pneg %p203
      // Predicated region
      $region9: #{tpu_custom_call.1} parent=5 // pred_check
        _
      $region10: #{tpu_custom_call.1} parent=5 // pred_check_branch
        %206 = sbr.rel (%p203) target = $region12
      $region11: #{tpu_custom_call.1} parent=5 // pred_region
        %s207 = ssub.s32 %s16, 1
        // Predicated region
        $region13: #{tpu_custom_call.1} parent=11 // pred_check
          %p208 = pneg %p63
        $region14: #{tpu_custom_call.1} parent=11 // pred_check_branch
          %210 = sbr.rel (%p208) target = $region16
        $region15: #{tpu_custom_call.1} parent=11 // pred_region
          %s212 = ssub.s32 1280, 1280
          %213 = vsyncadd [#allocation3], %s212
          %s214 = sshll.u32 [#allocation2], 4
          %s215 = int_to_ptr.vmem [resolvable:$true] %s214
          %220 = dma.hbm_to_vmem [thread:$0]  %s1, 1280, %s215, [#allocation3], 320, 320, 20
        $region16: #{tpu_custom_call.1} parent=11 // pred_fallthru
          _
      $region12: #{tpu_custom_call.1} parent=5 // pred_fallthru
        _
      %p221 = scmp.lt.s32.totalorder %s16, 2
      // Predicated region
      $region17: #{tpu_custom_call.1} parent=5 // pred_check
        %p222 = pneg %p221
      $region18: #{tpu_custom_call.1} parent=5 // pred_check_branch
        %224 = sbr.rel (%p222) target = $region20
      $region19: #{tpu_custom_call.1} parent=5 // pred_region
        // Predicated region
        $region21: #{tpu_custom_call.1} parent=19 // pred_check
          %p225 = pneg %p36
        $region22: #{tpu_custom_call.1} parent=19 // pred_check_branch
          %227 = sbr.rel (%p225) target = $region24
        $region23: #{tpu_custom_call.1} parent=19 // pred_region
          %p228 = scmp.lt.s32.totalorder %s16, 1
          %s229 = scalar_select %p228, %s16, 1
          %s230 = smul.addr %s229, 4
          %s231 = scalar_lea.vmem %s0, %s230
        $region24: #{tpu_custom_call.1} parent=19 // pred_fallthru
          _
        // Predicated region
        $region25: #{tpu_custom_call.1} parent=19 // pred_check
          %p232 = pneg %p83
        $region26: #{tpu_custom_call.1} parent=19 // pred_check_branch
          %234 = sbr.rel (%p232) target = $region28
        $region27: #{tpu_custom_call.1} parent=19 // pred_region
          %p235 = scmp.lt.s32.totalorder %s16, 1
          %s236 = scalar_select %p235, %s16, 1
          %s237 = smul.addr %s236, 8
          %s238 = scalar_lea.vmem %s2, %s237
        $region28: #{tpu_custom_call.1} parent=19 // pred_fallthru
          _
        // Predicated region
        $region29: #{tpu_custom_call.1} parent=19 // pred_check
          %p239 = pneg %p109
        $region30: #{tpu_custom_call.1} parent=19 // pred_check_branch
          %241 = sbr.rel (%p239) target = $region32
        $region31: #{tpu_custom_call.1} parent=19 // pred_region
          %p242 = scmp.lt.s32.totalorder %s16, 1
          %s243 = scalar_select %p242, %s16, 1
          %s244 = smul.addr %s243, 8
          %s245 = scalar_lea.vmem %s3, %s244
        $region32: #{tpu_custom_call.1} parent=19 // pred_fallthru
          _
        // Predicated region
        $region33: #{tpu_custom_call.1} parent=19 // pred_check
          %p246 = pneg %p135
        $region34: #{tpu_custom_call.1} parent=19 // pred_check_branch
          %248 = sbr.rel (%p246) target = $region36
        $region35: #{tpu_custom_call.1} parent=19 // pred_region
          %p249 = scmp.lt.s32.totalorder %s16, 1
          %s250 = scalar_select %p249, %s16, 1
          %s251 = smul.addr %s250, 8
          %s252 = scalar_lea.vmem %s4, %s251
        $region36: #{tpu_custom_call.1} parent=19 // pred_fallthru
          _
        // Predicated region
        $region37: #{tpu_custom_call.1} parent=19 // pred_check
          %p253 = pneg %p161
        $region38: #{tpu_custom_call.1} parent=19 // pred_check_branch
          %255 = sbr.rel (%p253) target = $region40
        $region39: #{tpu_custom_call.1} parent=19 // pred_region
          %p256 = scmp.lt.s32.totalorder %s16, 1
          %s257 = scalar_select %p256, %s16, 1
          %s258 = smul.addr %s257, 8
          %s259 = scalar_lea.vmem %s5, %s258
        $region40: #{tpu_custom_call.1} parent=19 // pred_fallthru
          _
      $region20: #{tpu_custom_call.1} parent=5 // pred_fallthru
        _
      %p260 = scmp.le.s32.totalorder 1, %s16
      %p261 = scmp.lt.s32.totalorder %s16, 3
      %p262 = pnand %p260, %p261
      %p263 = pneg %p262
      // Predicated region
      $region41: #{tpu_custom_call.1} parent=5 // pred_check
        _
      $region42: #{tpu_custom_call.1} parent=5 // pred_check_branch
        %265 = sbr.rel (%p262) target = $region44
      $region43: #{tpu_custom_call.1} parent=5 // pred_region
        %s266 = ssub.s32 %s16, 1
        // Predicated region
        $region45: #{tpu_custom_call.1} parent=43 // pred_check
          %p267 = pneg %p63
        $region46: #{tpu_custom_call.1} parent=43 // pred_check_branch
          %269 = sbr.rel (%p267) target = $region48
        $region47: #{tpu_custom_call.1} parent=43 // pred_region
          %270 = dma.done [#allocation3], 1280
        $region48: #{tpu_custom_call.1} parent=43 // pred_fallthru
          _
        %p271 = scmp.lt.s32.totalorder %s21, 1
        %s272 = scalar_select %p271, %s21, 1
        %s273 = smul.addr %s272, 4
        %s274 = scalar_lea.vmem %s0, %s273
        %p275 = pneg %p42
        %p276 = pneg %p39
        %p277 = pneg %p63
        %p278 = pneg %p60
        %p279 = scmp.lt.s32.totalorder %s21, 1
        %s280 = scalar_select %p279, %s21, 1
        %s281 = smul.addr %s280, 8
        %s282 = scalar_lea.vmem %s2, %s281
        %p283 = pneg %p89
        %p284 = pneg %p86
        %p285 = scmp.lt.s32.totalorder %s21, 1
        %s286 = scalar_select %p285, %s21, 1
        %s287 = smul.addr %s286, 8
        %s288 = scalar_lea.vmem %s3, %s287
        %p289 = pneg %p115
        %p290 = pneg %p112
        %p291 = scmp.lt.s32.totalorder %s21, 1
        %s292 = scalar_select %p291, %s21, 1
        %s293 = smul.addr %s292, 8
        %s294 = scalar_lea.vmem %s4, %s293
        %p295 = pneg %p141
        %p296 = pneg %p138
        %p297 = scmp.lt.s32.totalorder %s21, 1
        %s298 = scalar_select %p297, %s21, 1
        %s299 = smul.addr %s298, 8
        %s300 = scalar_lea.vmem %s5, %s299
        %p301 = pneg %p167
        %p302 = pneg %p164
        %p303 = pneg %p193
        %p304 = pneg %p190
        %s305 = sand.u32 %s180, 1
        %s306 = scalar_lea.sflag [#allocation4], %s305
        %s307 = sand.u32 %s180, 1
        %s308 = scalar_lea.vmem [#allocation5], %s307
        %p309 = scmp.lt.s32.totalorder %s21, 1
        %s310 = scalar_select %p309, %s21, 1
        %s311 = smul.addr %s310, 4
        %s312 = scalar_lea.vmem %s0, %s311
        %p313 = scmp.lt.s32.totalorder %s21, 1
        %s314 = scalar_select %p313, %s21, 1
        %s315 = smul.addr %s314, 8
        %s316 = scalar_lea.vmem %s2, %s315
        %p317 = scmp.lt.s32.totalorder %s21, 1
        %s318 = scalar_select %p317, %s21, 1
        %s319 = smul.addr %s318, 8
        %s320 = scalar_lea.vmem %s3, %s319
        %p321 = scmp.lt.s32.totalorder %s21, 1
        %s322 = scalar_select %p321, %s21, 1
        %s323 = smul.addr %s322, 8
        %s324 = scalar_lea.vmem %s4, %s323
        %p325 = scmp.lt.s32.totalorder %s21, 1
        %s326 = scalar_select %p325, %s21, 1
        %s327 = smul.addr %s326, 8
        %s328 = scalar_lea.vmem %s5, %s327
        %v330 = vld [vmem:[%s312] sm:$0xf]
        %v331 = vld [vmem:[#allocation2] sm:$0xff]
        %v332 = vld [vmem:[#allocation2 + $0x8] sm:$0xff]
        %v333 = vld [vmem:[#allocation2 + $0x10] sm:$0xf]
        %v334 = vld [vmem:[#allocation2 + $0x14] sm:$0xff]
        %v335 = vld [vmem:[#allocation2 + $0x1c] sm:$0xff]
        %v336 = vld [vmem:[#allocation2 + $0x24] sm:$0xf]
        %v337 = vld [vmem:[#allocation2 + $0x28] sm:$0xff]
        %v338 = vld [vmem:[#allocation2 + $0x30] sm:$0xff]
        %v339 = vld [vmem:[#allocation2 + $0x38] sm:$0xf]
        %v340 = vld [vmem:[#allocation2 + $0x3c] sm:$0xff]
        %v341 = vld [vmem:[#allocation2 + $0x44] sm:$0xff]
        %v342 = vld [vmem:[#allocation2 + $0x4c] sm:$0xf]
        %v355 = vunpack.c.l.b16 %v331
        %v356 = vunpack.c.h.b16 %v331
        %v357 = vunpack.c.l.b16 %v332
        %v358 = vunpack.c.h.b16 %v332
        %v359 = vunpack.c.l.b16 %v333
        %v360 = vunpack.c.l.b16 %v334
        %v361 = vunpack.c.h.b16 %v334
        %v362 = vunpack.c.l.b16 %v335
        %v363 = vunpack.c.h.b16 %v335
        %v364 = vunpack.c.l.b16 %v336
        %v365 = vunpack.c.l.b16 %v337
        %v366 = vunpack.c.h.b16 %v337
        %v367 = vunpack.c.l.b16 %v338
        %v368 = vunpack.c.h.b16 %v338
        %v369 = vunpack.c.l.b16 %v339
        %v370 = vunpack.c.l.b16 %v340
        %v371 = vunpack.c.h.b16 %v340
        %v372 = vunpack.c.l.b16 %v341
        %v373 = vunpack.c.h.b16 %v341
        %v374 = vunpack.c.l.b16 %v342
        %v375 = vpack.c.b16 %v360, %v355
        %v376 = vpack.c.b16 %v361, %v356
        %v377 = vpack.c.b16 %v362, %v357
        %v378 = vpack.c.b16 %v363, %v358
        %v379 = vpack.c.b16 %v364, %v359
        %v380 = vpack.c.b16 %v370, %v365
        %v381 = vpack.c.b16 %v371, %v366
        %v382 = vpack.c.b16 %v372, %v367
        %v383 = vpack.c.b16 %v373, %v368
        %v384 = vpack.c.b16 %v374, %v369
        %vm395 = vcmask 261120
        %v397 = vsel %vm395, %v330, 0
        %399 = vmatprep.subr.bf16.mxu0 %v376
        %400 = vmatpush1.bf16.msra.mxu0 %v375
        %401 = vmatprep.subr.bf16.mxu0 %v381
        %402 = vmatpush1.bf16.msra.mxu0 %v380
        %403 = vmatprep.subr.bf16.mxu0 0
        %404 = vmatpush1.bf16.msra.mxu0 0
        %405 = vmatprep.subr.bf16.mxu0 0
        %406 = vmatpush1.bf16.msra.mxu0 0
        %407 = vmatprep.subr.bf16.mxu0 0
        %408 = vmatpush1.bf16.msra.mxu0 0
        %409 = vmatprep.subr.bf16.mxu0 0
        %410 = vmatpush1.bf16.msra.mxu0 0
        %411 = vmatprep.subr.bf16.mxu0 0
        %412 = vmatpush1.bf16.msra.mxu0 0
        %413 = vmatprep.subr.bf16.mxu0 0
        %414 = vmatpush1.bf16.msra.mxu0 0
        %415 = vmatprep.subr.bf16.mxu0 0
        %416 = vmatpush1.bf16.msra.mxu0 0
        %417 = vmatprep.subr.bf16.mxu0 0
        %418 = vmatpush1.bf16.msra.mxu0 0
        %419 = vmatprep.subr.bf16.mxu0 0
        %420 = vmatpush1.bf16.msra.mxu0 0
        %421 = vmatprep.subr.bf16.mxu0 0
        %422 = vmatpush1.bf16.msra.mxu0 0
        %423 = vmatprep.subr.bf16.mxu0 0
        %424 = vmatpush1.bf16.msra.mxu0 0
        %425 = vmatprep.subr.bf16.mxu0 0
        %426 = vmatpush1.bf16.msra.mxu0 0
        %427 = vmatprep.subr.bf16.mxu0 0
        %428 = vmatpush1.bf16.msra.mxu0 0
        %429 = vmatprep.subr.bf16.mxu0 0
        %430 = vmatpush1.bf16.msra.mxu0 0
        %431 = vmatprep.mubr.bf16.mxu0 0
        %432 = vmatmul.mubr.bf16.gmra.mrb[0].mxu0 %v397
        %v433 = vpop.f32.mrb[0].mxu0
        %v434 = vadd.f32 0.0, %v433
        %v435 = vpop.f32.mrb[0].mxu0
        %v436 = vadd.f32 0.0, %v435
        %v437 = vpop.f32.mrb[0].mxu0
        %v438 = vpop.f32.mrb[0].mxu0
        %439 = vdwg.mxu0
        %440 = vmatprep.subr.bf16.mxu0 %v378
        %441 = vmatpush1.bf16.msra.mxu0 %v377
        %442 = vmatprep.subr.bf16.mxu0 %v383
        %443 = vmatpush1.bf16.msra.mxu0 %v382
        %444 = vmatprep.subr.bf16.mxu0 0
        %445 = vmatpush1.bf16.msra.mxu0 0
        %446 = vmatprep.subr.bf16.mxu0 0
        %447 = vmatpush1.bf16.msra.mxu0 0
        %448 = vmatprep.subr.bf16.mxu0 0
        %449 = vmatpush1.bf16.msra.mxu0 0
        %450 = vmatprep.subr.bf16.mxu0 0
        %451 = vmatpush1.bf16.msra.mxu0 0
        %452 = vmatprep.subr.bf16.mxu0 0
        %453 = vmatpush1.bf16.msra.mxu0 0
        %454 = vmatprep.subr.bf16.mxu0 0
        %455 = vmatpush1.bf16.msra.mxu0 0
        %456 = vmatprep.subr.bf16.mxu0 0
        %457 = vmatpush1.bf16.msra.mxu0 0
        %458 = vmatprep.subr.bf16.mxu0 0
        %459 = vmatpush1.bf16.msra.mxu0 0
        %460 = vmatprep.subr.bf16.mxu0 0
        %461 = vmatpush1.bf16.msra.mxu0 0
        %462 = vmatprep.subr.bf16.mxu0 0
        %463 = vmatpush1.bf16.msra.mxu0 0
        %464 = vmatprep.subr.bf16.mxu0 0
        %465 = vmatpush1.bf16.msra.mxu0 0
        %466 = vmatprep.subr.bf16.mxu0 0
        %467 = vmatpush1.bf16.msra.mxu0 0
        %468 = vmatprep.subr.bf16.mxu0 0
        %469 = vmatpush1.bf16.msra.mxu0 0
        %470 = vmatprep.subr.bf16.mxu0 0
        %471 = vmatpush1.bf16.msra.mxu0 0
        %472 = vmatprep.mubr.bf16.mxu0 0
        %473 = vmatmul.mubr.bf16.gmra.mrb[0].mxu0 %v397
        %v474 = vpop.f32.mrb[0].mxu0
        %v475 = vadd.f32 0.0, %v474
        %v476 = vpop.f32.mrb[0].mxu0
        %v477 = vadd.f32 0.0, %v476
        %v478 = vpop.f32.mrb[0].mxu0
        %v479 = vpop.f32.mrb[0].mxu0
        %480 = vdwg.mxu0
        %481 = vmatprep.subr.bf16.mxu0 0
        %482 = vmatpush1.bf16.msra.mxu0 %v379
        %483 = vmatprep.subr.bf16.mxu0 0
        %484 = vmatpush1.bf16.msra.mxu0 %v384
        %485 = vmatprep.subr.bf16.mxu0 0
        %486 = vmatpush1.bf16.msra.mxu0 0
        %487 = vmatprep.subr.bf16.mxu0 0
        %488 = vmatpush1.bf16.msra.mxu0 0
        %489 = vmatprep.subr.bf16.mxu0 0
        %490 = vmatpush1.bf16.msra.mxu0 0
        %491 = vmatprep.subr.bf16.mxu0 0
        %492 = vmatpush1.bf16.msra.mxu0 0
        %493 = vmatprep.subr.bf16.mxu0 0
        %494 = vmatpush1.bf16.msra.mxu0 0
        %495 = vmatprep.subr.bf16.mxu0 0
        %496 = vmatpush1.bf16.msra.mxu0 0
        %497 = vmatprep.subr.bf16.mxu0 0
        %498 = vmatpush1.bf16.msra.mxu0 0
        %499 = vmatprep.subr.bf16.mxu0 0
        %500 = vmatpush1.bf16.msra.mxu0 0
        %501 = vmatprep.subr.bf16.mxu0 0
        %502 = vmatpush1.bf16.msra.mxu0 0
        %503 = vmatprep.subr.bf16.mxu0 0
        %504 = vmatpush1.bf16.msra.mxu0 0
        %505 = vmatprep.subr.bf16.mxu0 0
        %506 = vmatpush1.bf16.msra.mxu0 0
        %507 = vmatprep.subr.bf16.mxu0 0
        %508 = vmatpush1.bf16.msra.mxu0 0
        %509 = vmatprep.subr.bf16.mxu0 0
        %510 = vmatpush1.bf16.msra.mxu0 0
        %511 = vmatprep.subr.bf16.mxu0 0
        %512 = vmatpush1.bf16.msra.mxu0 0
        %513 = vmatprep.mubr.bf16.mxu0 0
        %514 = vmatmul.mubr.bf16.gmra.mrb[0].mxu0 %v397
        %v515 = vpop.f32.mrb[0].mxu0
        %v516 = vadd.f32 0.0, %v515
        %v517 = vpop.f32.mrb[0].mxu0
        %v518 = vpop.f32.mrb[0].mxu0
        %v519 = vpop.f32.mrb[0].mxu0
        %520 = vdwg.mxu0
        %v521 = vld [vmem:[%s316] sm:$0xff]
        %vm522 = vcmp.gt.s32.totalorder %v521, 0
        %v523 = vsel %vm522, %v521, 0
        %v524 = vlaneseq
        %v525 = vand.u32 %v524, 127
        %v526 = vadd.s32 %v525, 128
        %v527 = vadd.s32 %v525, 256
        %v528 = vadd.s32 %v525, 384
        %v529 = vadd.s32 %v525, 512
        %v530 = vmax.f32 %v434, %v516
        %v531 = vmax.f32 %v530, %v436
        %v532 = vmax.f32 %v475, %v477
        %v533 = vmax.f32 %v531, %v532
        %534 = vmax.xlane.f32.xlu0 %v533
        %v535 = vpop.xlane.xlu0 %534
        %v536 = vsub.f32 %v434, %v535
        %v537 = vsub.f32 %v436, %v535
        %v538 = vsub.f32 %v475, %v535
        %v539 = vsub.f32 %v477, %v535
        %v540 = vsub.f32 %v516, %v535
        %v541 = vmul.f32 %v536, 1.442695
        %v542 = vpow.pop %v541
        %v543 = vmul.f32 %v537, 1.442695
        %v544 = vpow.pop %v543
        %v545 = vmul.f32 %v538, 1.442695
        %v546 = vpow.pop %v545
        %v547 = vmul.f32 %v539, 1.442695
        %v548 = vpow.pop %v547
        %v549 = vmul.f32 %v540, 1.442695
        %v550 = vpow.pop %v549
        %v551 = vadd.f32 %v542, %v544
        %v552 = vadd.f32 %v551, %v546
        %v553 = vadd.f32 %v552, %v548
        %v554 = vadd.f32 %v553, %v550
        %555 = vadd.xlane.f32.xlu0 %v554
        %v556 = vpop.xlane.xlu0 %555
        %557 = vset.pattern.permute.xlu0 0
        %558 = vperm.xlu0 %557, %v523
        %v559 = vpop.permute.xlu0 %558
        %vm560 = vcmp.eq.s32.totalorder %v525, %v559
        %vm561 = vcmp.eq.s32.totalorder %v526, %v559
        %vm562 = vcmp.eq.s32.totalorder %v527, %v559
        %vm563 = vcmp.eq.s32.totalorder %v528, %v559
        %vm564 = vcmp.eq.s32.totalorder %v529, %v559
        %v565 = vsel %vm560, %v434, 0.0
        %v566 = vsel %vm561, %v436, 0.0
        %v567 = vsel %vm562, %v475, 0.0
        %v568 = vsel %vm563, %v477, 0.0
        %v569 = vsel %vm564, %v516, 0.0
        %v570 = vadd.f32 %v565, %v566
        %v571 = vadd.f32 %v570, %v567
        %v572 = vadd.f32 %v571, %v568
        %v573 = vadd.f32 %v572, %v569
        %574 = vadd.xlane.f32.xlu0 %v573
        %v575 = vpop.xlane.xlu0 %574
        %v576 = vlog2.pop %v556
        %v577 = vmul.f32 %v576, 0.6931472
        %v578 = vadd.f32 %v535, %v577
        %v579 = vsub.f32 %v575, %v578
        %vm580 = vcmp.ne.s32.totalorder %v521, 4294967196
        %v581 = vsel %vm580, 1, 0
        %v582 = vcvt.s32.f32 %v581
        %v583 = vld [vmem:[%s320] sm:$0xff]
        %v584 = vld [vmem:[%s324] sm:$0xff]
        %v585 = vld [vmem:[%s328] sm:$0xff]
        %v586 = vsub.f32 %v579, %v583
        %v587 = vmul.f32 %v586, 1.442695
        %v588 = vpow.pop %v587
        %v589 = vmax.f32 %v588, 0.9
        %v590 = vmin.f32 %v589, 1.1
        %v591 = vmul.f32 %v588, %v585
        %v592 = vmul.f32 %v590, %v585
        %v593 = vmin.f32 %v591, %v592
        %v594 = vmul.f32 %v593, %v582
        %v595 = vsub.f32 %v584, %v579
        %v596 = vmul.f32 %v595, 1.442695
        %v597 = vpow.pop %v596
        %v598 = vsub.f32 %v597, 1.0
        %v599 = vsub.f32 %v598, %v584
        %v600 = vadd.f32 %v599, %v579
        %v601 = vmul.f32 %v600, %v582
        %vm602 = vcmp.eq.s32.totalorder %v525, 0
        %vm603 = vcmp.eq.s32.totalorder %v525, 1
        %605 = vset.pattern.permute.xlu0 0
        %606 = vperm.xlu0 %605, %v601
        %v607 = vpop.permute.xlu0 %606
        %610 = vset.pattern.permute.xlu0 0
        %611 = vperm.xlu0 %610, %v582
        %v612 = vpop.permute.xlu0 %611
        %v614 = vsel %vm603, %v607, %v612
        %616 = vset.pattern.permute.xlu0 0
        %617 = vperm.xlu0 %616, %v594
        %v618 = vpop.permute.xlu0 %617
        %v620 = vsel %vm602, %v618, %v614
        %v621 = vlaneseq
        %v622 = vshrl.u32 %v621, 7
        %v623 = vmul.u32 %v622, 8
        %vm624 = vcmp.ge.s32.totalorder %v525, %v623
        %v625 = vadd.s32 %v623, 8
        %vm626 = vcmp.lt.s32.totalorder %v525, %v625
        %vm627 = vmand %vm624, %vm626
        %v628 = vsel %vm627, 1, 0
        %v629 = vcvt.s32.f32 %v628
        %vm630 = vcmask 64512
        %v632 = vsel %vm630, %v629, 0
        %634 = vmatprep.subr.mxu0 0.0
        %635 = vmatpush1.msra.mxu0 %v620
        %636 = vmatprep.subr.mxu0 0.0
        %637 = vmatpush1.msra.mxu0 0.0
        %638 = vmatprep.subr.mxu0 0.0
        %639 = vmatpush1.msra.mxu0 0.0
        %640 = vmatprep.subr.mxu0 0.0
        %641 = vmatpush1.msra.mxu0 0.0
        %642 = vmatprep.subr.mxu0 0.0
        %643 = vmatpush1.msra.mxu0 0.0
        %644 = vmatprep.subr.mxu0 0.0
        %645 = vmatpush1.msra.mxu0 0.0
        %646 = vmatprep.subr.mxu0 0.0
        %647 = vmatpush1.msra.mxu0 0.0
        %648 = vmatprep.subr.mxu0 0.0
        %649 = vmatpush1.msra.mxu0 0.0
        %650 = vmatprep.subr.mxu0 0.0
        %651 = vmatpush1.msra.mxu0 0.0
        %652 = vmatprep.subr.mxu0 0.0
        %653 = vmatpush1.msra.mxu0 0.0
        %654 = vmatprep.subr.mxu0 0.0
        %655 = vmatpush1.msra.mxu0 0.0
        %656 = vmatprep.subr.mxu0 0.0
        %657 = vmatpush1.msra.mxu0 0.0
        %658 = vmatprep.subr.mxu0 0.0
        %659 = vmatpush1.msra.mxu0 0.0
        %660 = vmatprep.subr.mxu0 0.0
        %661 = vmatpush1.msra.mxu0 0.0
        %662 = vmatprep.subr.mxu0 0.0
        %663 = vmatpush1.msra.mxu0 0.0
        %664 = vmatprep.subr.mxu0 0.0
        %665 = vmatpush1.msra.mxu0 0.0
        %666 = vmatprep.subr.mxu0 0.0
        %667 = vmatpush1.msra.mxu0 0.0
        %668 = vmatprep.subr.mxu0 0.0
        %669 = vmatpush1.msra.mxu0 0.0
        %670 = vmatprep.subr.mxu0 0.0
        %671 = vmatpush1.msra.mxu0 0.0
        %672 = vmatprep.subr.mxu0 0.0
        %673 = vmatpush1.msra.mxu0 0.0
        %674 = vmatprep.subr.mxu0 0.0
        %675 = vmatpush1.msra.mxu0 0.0
        %676 = vmatprep.subr.mxu0 0.0
        %677 = vmatpush1.msra.mxu0 0.0
        %678 = vmatprep.subr.mxu0 0.0
        %679 = vmatpush1.msra.mxu0 0.0
        %680 = vmatprep.subr.mxu0 0.0
        %681 = vmatpush1.msra.mxu0 0.0
        %682 = vmatprep.subr.mxu0 0.0
        %683 = vmatpush1.msra.mxu0 0.0
        %684 = vmatprep.subr.mxu0 0.0
        %685 = vmatpush1.msra.mxu0 0.0
        %686 = vmatprep.subr.mxu0 0.0
        %687 = vmatpush1.msra.mxu0 0.0
        %688 = vmatprep.subr.mxu0 0.0
        %689 = vmatpush1.msra.mxu0 0.0
        %690 = vmatprep.subr.mxu0 0.0
        %691 = vmatpush1.msra.mxu0 0.0
        %692 = vmatprep.subr.mxu0 0.0
        %693 = vmatpush1.msra.mxu0 0.0
        %694 = vmatprep.subr.mxu0 0.0
        %695 = vmatpush1.msra.mxu0 0.0
        %696 = vmatprep.subr.mxu0 0.0
        %697 = vmatpush1.msra.mxu0 0.0
        %698 = vmatprep.mubr.f32.mxu0 0.0
        %699 = vmatmul.mubr.f32.gmra.mrb[0].mxu0 %v632
        %v700 = vpop.f32.mrb[0].mxu0
        %v701 = vadd.f32 0.0, %v700
        %v702 = vpop.f32.mrb[0].mxu0
        %703 = vdwg.mxu0
        %705 = vrot.lane.b32.xlu0 %v701, 126
        %v706 = vpop.permute.xlu0 %705
        %v708 = vrcp.pop %v706
        %v709 = vmul.f32 %v701, %v708
        %710 = vrot.lane.b32.xlu0 %v701, 127
        %v711 = vpop.permute.xlu0 %710
        %v713 = vrcp.pop %v711
        %v714 = vmul.f32 %v701, %v713
        %716 = vset.pattern.permute.xlu0 0
        %717 = vperm.xlu0 %716, %v709
        %v718 = vpop.permute.xlu0 %717
        %v720 = vsel %vm602, %v718, 0.0
        %722 = vset.pattern.permute.xlu0 1
        %723 = vperm.xlu0 %722, %v714
        %v724 = vpop.permute.xlu0 %723
        %v726 = vsel %vm603, %v724, 0.0
        %v727 = vadd.f32 %v720, %v726
        %728 = vst [vmem:[%s308] sm:$0x1] %v727
        %s729 = sand.u32 %s180, 1
        %s730 = scalar_lea.sflag [#allocation4], %s729
        %s731 = sand.u32 %s180, 1
        %s732 = scalar_lea.vmem [#allocation5], %s731
        // Predicated region
        $region49: #{tpu_custom_call.1} parent=43 // pred_check
          %p733 = pneg %p190
        $region50: #{tpu_custom_call.1} parent=43 // pred_check_branch
          %735 = sbr.rel (%p733) target = $region52
        $region51: #{tpu_custom_call.1} parent=43 // pred_region
          %s737 = ssub.s32 16, 16
          %738 = vsyncadd %s730, %s737
          %s739 = smul.addr %s21, 16
          %s740 = scalar_lea.hbm %s6, %s739
          %s742 = sshll.u32 %s732, 4
          %s743 = int_to_ptr.vmem [resolvable:$true] %s742
          %745 = dma.vmem_to_hbm [thread:$0]  %s743, 16, %s740, %s730
        $region52: #{tpu_custom_call.1} parent=43 // pred_fallthru
          _
      $region44: #{tpu_custom_call.1} parent=5 // pred_fallthru
        _
      %p746 = scmp.le.s32.totalorder 2, %s16
      // Predicated region
      $region53: #{tpu_custom_call.1} parent=5 // pred_check
        %p747 = pneg %p746
      $region54: #{tpu_custom_call.1} parent=5 // pred_check_branch
        %749 = sbr.rel (%p747) target = $region56
      $region55: #{tpu_custom_call.1} parent=5 // pred_region
        %s750 = ssub.s32 %s16, 2
        // Predicated region
        $region57: #{tpu_custom_call.1} parent=55 // pred_check
          %p751 = pneg %p196
        $region58: #{tpu_custom_call.1} parent=55 // pred_check_branch
          %753 = sbr.rel (%p751) target = $region60
        $region59: #{tpu_custom_call.1} parent=55 // pred_region
          %s754 = sand.u32 %s181, 1
          %s755 = scalar_lea.sflag [#allocation4], %s754
          %s756 = sand.u32 %s181, 1
          %s757 = scalar_lea.vmem [#allocation5], %s756
          %758 = dma.done %s755, 16
        $region60: #{tpu_custom_call.1} parent=55 // pred_fallthru
          _
      $region56: #{tpu_custom_call.1} parent=5 // pred_fallthru
        _
    $region6: #{tpu_custom_call.1} parent=1 // loop_footer
      %s20 = sadd.s32 1, %s16
    $region7: #{tpu_custom_call.1} parent=1 // loop_footer_branch
      %15 = sbr.rel target = $region3
    $region8: #{tpu_custom_call.1} parent=1 // loop_exit
      _
    %759 = vsyncpa [#allocation3], 1
    %s760 = scalar_lea.sflag [#allocation3], 1
    %761 = vsyncpa %s760, 1
    %762 = vsyncpa [#allocation4], 1
    %s763 = scalar_lea.sflag [#allocation4], 1
    %764 = vsyncpa %s763, 1

</llo_original>
